<compile_context>
chip_gen: v6e
topology: v6e:2x2x1
jax: 0.10.0
libtpu: 0.0.40
codegen_flags: <defaults>
</compile_context>

<pallas_src>
import jax
import jax.numpy as jnp
from jax.experimental import pallas as pl
from jax.experimental.pallas import tpu as pltpu

LANE = 128      # TPU lane width
C_PAD = 128     # 2 real classes padded to one full lane tile


def _round_up(x, m):
    return (x + m - 1) // m * m


def linear_net_kernel(x_ref, w1_ref, b1_ref, w2_ref, b2_ref, out_ref, pred_ref):
    # x_ref   : [tile_b, D_in]   bf16   (batch-tiled)
    # w1_ref  : [D_in, H_pad]    bf16   (VMEM-resident across batch tiles)
    # b1_ref  : [1, H_pad]       f32
    # w2_ref  : [H_pad, C_PAD]   bf16
    # b2_ref  : [1, C_PAD]       f32
    # out_ref : [tile_b, C_PAD]  f32    sigmoid probabilities; real classes in [:, :2]
    # pred_ref: [tile_b, C_PAD]  int32  argmax over the 2 real classes (broadcast across lanes)
    #
    # bf16 MXU matmuls with f32 accumulation; bias add / relu / sigmoid stay in f32
    # (v5e VPU/EUP have no bf16 path).
    h = jnp.dot(x_ref[...], w1_ref[...], preferred_element_type=jnp.float32)
    h = jnp.maximum(h + b1_ref[...], 0.0)
    logits = jnp.dot(h.astype(jnp.bfloat16), w2_ref[...],
                     preferred_element_type=jnp.float32) + b2_ref[...]
    out_ref[...] = jax.nn.sigmoid(logits)
    # Fused predict(): sigmoid is strictly monotone, so comparing logits == comparing
    # probabilities. Tie -> class 0 (matches torch.max / jnp.argmax first-index behavior).
    pred = (logits[:, 1:2] > logits[:, 0:1]).astype(jnp.int32)
    pred_ref[...] = jnp.broadcast_to(pred, pred_ref.shape)


def linear_net_forward(embeddings, w1, b1, w2, b2, *, tile_b=256):
    """embeddings: [B, D_in] f32 (stand-in for SentenceTransformer output).
    w1: [D_in, H], b1: [1, H], w2: [H, 2], b2: [1, 2]  (all f32, stored [in, out]).
    Returns (probs [B, 2] f32, pred [B] int32)."""
    B, D_in = embeddings.shape
    H = w1.shape[1]
    C = w2.shape[1]

    H_pad = _round_up(H, LANE)
    # Batch tile: for small B just one tile rounded to bf16 sublane packing (16 rows).
    tile_b = min(tile_b, _round_up(B, 16))
    B_pad = _round_up(B, tile_b)

    # Zero padding is exact: padded hidden columns give relu(0)=0 and contribute nothing to
    # the second matmul; padded class lanes are sliced off before returning.
    x_p = jnp.zeros((B_pad, D_in), jnp.float32).at[:B].set(embeddings)
    w1_p = jnp.zeros((D_in, H_pad), jnp.float32).at[:, :H].set(w1)
    b1_p = jnp.zeros((1, H_pad), jnp.float32).at[:, :H].set(b1.reshape(1, H))
    w2_p = jnp.zeros((H_pad, C_PAD), jnp.float32).at[:H, :C].set(w2)
    b2_p = jnp.zeros((1, C_PAD), jnp.float32).at[:, :C].set(b2.reshape(1, C))

    # bf16 matmul operands; biases / accumulation / epilogue stay f32.
    x_bf = x_p.astype(jnp.bfloat16)
    w1_bf = w1_p.astype(jnp.bfloat16)
    w2_bf = w2_p.astype(jnp.bfloat16)

    grid = (B_pad // tile_b,)
    probs, pred = pl.pallas_call(
        linear_net_kernel,
        out_shape=(
            jax.ShapeDtypeStruct((B_pad, C_PAD), jnp.float32),
            jax.ShapeDtypeStruct((B_pad, C_PAD), jnp.int32),
        ),
        grid_spec=pltpu.PrefetchScalarGridSpec(
            num_scalar_prefetch=0,
            grid=grid,
            in_specs=[
                pl.BlockSpec((tile_b, D_in), lambda i: (i, 0)),   # x: tiled over batch
                pl.BlockSpec((D_in, H_pad), lambda i: (0, 0)),    # weights: constant block
                pl.BlockSpec((1, H_pad), lambda i: (0, 0)),       #  -> DMA'd once, stay resident
                pl.BlockSpec((H_pad, C_PAD), lambda i: (0, 0)),
                pl.BlockSpec((1, C_PAD), lambda i: (0, 0)),
            ],
            out_specs=[
                pl.BlockSpec((tile_b, C_PAD), lambda i: (i, 0)),
                pl.BlockSpec((tile_b, C_PAD), lambda i: (i, 0)),
            ],
        ),
        compiler_params=pltpu.CompilerParams(
            dimension_semantics=("parallel",),   # shard batch tiles across TCs on v7x
        ),
    )(x_bf, w1_bf, b1_p, w2_bf, b2_p)

    return probs[:B, :C], pred[:B, 0]


def init_params(key, input_size, hidden_size):
    """Deterministic init mimicking nn.Linear default (uniform +/- 1/sqrt(fan_in))."""
    k1, k2, k3, k4 = jax.random.split(key, 4)
    lim1 = 1.0 / jnp.sqrt(jnp.float32(input_size))
    lim2 = 1.0 / jnp.sqrt(jnp.float32(hidden_size))
    # stored pre-transposed: [in, out]
    w1 = jax.random.uniform(k1, (input_size, hidden_size), jnp.float32, -lim1, lim1)
    b1 = jax.random.uniform(k2, (1, hidden_size), jnp.float32, -lim1, lim1)
    w2 = jax.random.uniform(k3, (hidden_size, 2), jnp.float32, -lim2, lim2)
    b2 = jax.random.uniform(k4, (1, 2), jnp.float32, -lim2, lim2)
    return w1, b1, w2, b2


if __name__ == "__main__":
    # Small, MiniLM-flavored shapes: batch=8 sentences, embedding dim=384, hidden=64.
    B, INPUT_SIZE, HIDDEN_SIZE = 8, 384, 64

    key = jax.random.PRNGKey(0)
    k_emb, k_params = jax.random.split(key)

    # Stand-in for SentenceTransformer embeddings of the input sentences.
    embeddings = jax.random.normal(k_emb, (B, INPUT_SIZE), jnp.float32)
    w1, b1, w2, b2 = init_params(k_params, INPUT_SIZE, HIDDEN_SIZE)

    probs, pred = linear_net_forward(embeddings, w1, b1, w2, b2)
    probs, pred = jax.block_until_ready((probs, pred))

    # Pure-f32 reference for LinearNet.forward / .predict semantics.
    ref = jax.nn.sigmoid(jnp.maximum(embeddings @ w1 + b1, 0.0) @ w2 + b2)

    assert probs.shape == (B, 2) and pred.shape == (B,)
    # bf16 matmul operands -> ~1e-2-level deviation from the f32 reference.
    assert jnp.allclose(probs, ref, atol=2e-2, rtol=2e-2), float(jnp.max(jnp.abs(probs - ref)))
    # Fused argmax must agree with argmax over the kernel's own probabilities.
    assert jnp.array_equal(pred, jnp.argmax(probs, axis=1))

    print("KERNEL_OK")
</pallas_src>

<mosaic_0001>
module attributes {stable_mosaic.version = 11 : i64} {
  func.func @linear_net_kernel(%arg0: i32, %arg1: memref<16x384xbf16, #tpu.memory_space<vmem>>, %arg2: memref<384x128xbf16, #tpu.memory_space<vmem>>, %arg3: memref<1x128xf32, #tpu.memory_space<vmem>>, %arg4: memref<128x128xbf16, #tpu.memory_space<vmem>>, %arg5: memref<1x128xf32, #tpu.memory_space<vmem>>, %arg6: memref<16x128xf32, #tpu.memory_space<vmem>>, %arg7: memref<16x128xi32, #tpu.memory_space<vmem>>) attributes {dimension_semantics = [#tpu.dimension_semantics<parallel>], iteration_bounds = array<i64: 1>, scalar_prefetch = 0 : i64, scratch_operands = 0 : i64, tpu.core_type = #tpu.core_type<tc>, window_params = [{transform_indices = @transform_0, window_bounds = array<i64: 16, 384>}, {pipeline_mode = #tpu.pipeline_mode<synchronous>, transform_indices = @transform_1, window_bounds = array<i64: 384, 128>}, {pipeline_mode = #tpu.pipeline_mode<synchronous>, transform_indices = @transform_2, window_bounds = array<i64: 1, 128>}, {pipeline_mode = #tpu.pipeline_mode<synchronous>, transform_indices = @transform_3, window_bounds = array<i64: 128, 128>}, {pipeline_mode = #tpu.pipeline_mode<synchronous>, transform_indices = @transform_4, window_bounds = array<i64: 1, 128>}, {transform_indices = @transform_5, window_bounds = array<i64: 16, 128>}, {transform_indices = @transform_6, window_bounds = array<i64: 16, 128>}]} {
    %c0 = arith.constant 0 : index
    %c0_0 = arith.constant 0 : index
    %0 = vector.load %arg1[%c0, %c0_0] : memref<16x384xbf16, #tpu.memory_space<vmem>>, vector<16x384xbf16>
    %c0_1 = arith.constant 0 : index
    %c0_2 = arith.constant 0 : index
    %1 = vector.load %arg2[%c0_1, %c0_2] : memref<384x128xbf16, #tpu.memory_space<vmem>>, vector<384x128xbf16>
    %cst = arith.constant dense<0.000000e+00> : vector<16x128xf32>
    %2 = tpu.matmul %0, %1, %cst {dimension_numbers = #tpu.dot_dimension_numbers<[1], [0], [0], [1], [0, 0, 1, 1], [], []>} : vector<16x384xbf16>, vector<384x128xbf16>, vector<16x128xf32> -> vector<16x128xf32>
    %c0_3 = arith.constant 0 : index
    %c0_4 = arith.constant 0 : index
    %3 = vector.load %arg3[%c0_3, %c0_4] : memref<1x128xf32, #tpu.memory_space<vmem>>, vector<1x128xf32>
    %4 = vector.broadcast %3 : vector<1x128xf32> to vector<16x128xf32>
    %5 = arith.addf %2, %4 : vector<16x128xf32>
    %cst_5 = arith.constant 0.000000e+00 : f32
    %6 = vector.broadcast %cst_5 : f32 to vector<16x128xf32>
    %7 = arith.maximumf %5, %6 : vector<16x128xf32>
    %8 = arith.truncf %7 : vector<16x128xf32> to vector<16x128xbf16>
    %c0_6 = arith.constant 0 : index
    %c0_7 = arith.constant 0 : index
    %9 = vector.load %arg4[%c0_6, %c0_7] : memref<128x128xbf16, #tpu.memory_space<vmem>>, vector<128x128xbf16>
    %cst_8 = arith.constant dense<0.000000e+00> : vector<16x128xf32>
    %10 = tpu.matmul %8, %9, %cst_8 {dimension_numbers = #tpu.dot_dimension_numbers<[1], [0], [0], [1], [0, 0, 1, 1], [], []>} : vector<16x128xbf16>, vector<128x128xbf16>, vector<16x128xf32> -> vector<16x128xf32>
    %c0_9 = arith.constant 0 : index
    %c0_10 = arith.constant 0 : index
    %11 = vector.load %arg5[%c0_9, %c0_10] : memref<1x128xf32, #tpu.memory_space<vmem>>, vector<1x128xf32>
    %12 = vector.broadcast %11 : vector<1x128xf32> to vector<16x128xf32>
    %13 = arith.addf %10, %12 : vector<16x128xf32>
    %14 = arith.negf %13 : vector<16x128xf32>
    %15 = math.exp %14 : vector<16x128xf32>
    %cst_11 = arith.constant 1.000000e+00 : f32
    %16 = vector.broadcast %cst_11 : f32 to vector<16x128xf32>
    %17 = arith.addf %16, %15 : vector<16x128xf32>
    %18 = arith.divf %16, %17 : vector<16x128xf32>
    %c0_12 = arith.constant 0 : index
    %c0_13 = arith.constant 0 : index
    %19 = vector.load %arg6[%c0_12, %c0_13] : memref<16x128xf32, #tpu.memory_space<vmem>>, vector<16x128xf32>
    tpu.vector_store %arg6[%c0_12, %c0_13], %18 {strides = array<i32>} : memref<16x128xf32, #tpu.memory_space<vmem>>, vector<16x128xf32>,
    %20 = vector.extract_strided_slice %13 {offsets = [0, 1], sizes = [16, 1], strides = [1, 1]} : vector<16x128xf32> to vector<16x1xf32>
    %21 = vector.extract_strided_slice %13 {offsets = [0, 0], sizes = [16, 1], strides = [1, 1]} : vector<16x128xf32> to vector<16x1xf32>
    %22 = arith.cmpf ogt, %20, %21 : vector<16x1xf32>
    %23 = arith.extui %22 : vector<16x1xi1> to vector<16x1xi32>
    %24 = vector.shape_cast %23 : vector<16x1xi32> to vector<16x1xi32>
    %25 = vector.broadcast %24 : vector<16x1xi32> to vector<16x128xi32>
    %c0_14 = arith.constant 0 : index
    %c0_15 = arith.constant 0 : index
    %26 = vector.load %arg7[%c0_14, %c0_15] : memref<16x128xi32, #tpu.memory_space<vmem>>, vector<16x128xi32>
    tpu.vector_store %arg7[%c0_14, %c0_15], %25 {strides = array<i32>} : memref<16x128xi32, #tpu.memory_space<vmem>>, vector<16x128xi32>,
    return
  }
  func.func @transform_0(%arg0: i32) -> (i32, i32) {
    %c0_i32 = arith.constant 0 : i32
    %c0_i32_0 = arith.constant 0 : i32
    return %arg0, %c0_i32 : i32, i32
  }
  func.func @transform_1(%arg0: i32) -> (i32, i32) {
    %c0_i32 = arith.constant 0 : i32
    %c0_i32_0 = arith.constant 0 : i32
    %c0_i32_1 = arith.constant 0 : i32
    return %c0_i32, %c0_i32_0 : i32, i32
  }
  func.func @transform_2(%arg0: i32) -> (i32, i32) {
    %c0_i32 = arith.constant 0 : i32
    %c0_i32_0 = arith.constant 0 : i32
    %c0_i32_1 = arith.constant 0 : i32
    return %c0_i32, %c0_i32_0 : i32, i32
  }
  func.func @transform_3(%arg0: i32) -> (i32, i32) {
    %c0_i32 = arith.constant 0 : i32
    %c0_i32_0 = arith.constant 0 : i32
    %c0_i32_1 = arith.constant 0 : i32
    return %c0_i32, %c0_i32_0 : i32, i32
  }
  func.func @transform_4(%arg0: i32) -> (i32, i32) {
    %c0_i32 = arith.constant 0 : i32
    %c0_i32_0 = arith.constant 0 : i32
    %c0_i32_1 = arith.constant 0 : i32
    return %c0_i32, %c0_i32_0 : i32, i32
  }
  func.func @transform_5(%arg0: i32) -> (i32, i32) {
    %c0_i32 = arith.constant 0 : i32
    %c0_i32_0 = arith.constant 0 : i32
    return %arg0, %c0_i32 : i32, i32
  }
  func.func @transform_6(%arg0: i32) -> (i32, i32) {
    %c0_i32 = arith.constant 0 : i32
    %c0_i32_0 = arith.constant 0 : i32
    return %arg0, %c0_i32 : i32, i32
  }
}

</mosaic_0001>

<llo_original>
// kernel: tpu_custom_call.1
$region0: #{tpu_custom_call.1}
  #allocation0 [shape = 'u32[]', space=smem, size = 0x4, offset = 0x4, fixed_abs, tag = 'smem constant byte address 0x4 - core index']
  #allocation1 [shape = 'u32[144,128]{1,0:T(1,128)}', space=vmem, size = 0x12000, scoped, tag = 'internal scratch']
  %s0 = inlined_call_operand.hbm [shape: bf16[16,384], index: 0, kind: input, shape index: {}]
  %s1 = inlined_call_operand.hbm [shape: bf16[384,128], index: 1, kind: input, shape index: {}]
  %s2 = inlined_call_operand.vmem [shape: f32[1,128], index: 2, kind: input, shape index: {}]
  %s3 = inlined_call_operand.hbm [shape: bf16[128,128], index: 3, kind: input, shape index: {}]
  %s4 = inlined_call_operand.vmem [shape: f32[1,128], index: 4, kind: input, shape index: {}]
  %s5 = inlined_call_operand.hbm [shape: f32[16,128], index: 5, kind: output, shape index: {0}]
  %s6 = inlined_call_operand.hbm [shape: s32[16,128], index: 6, kind: output, shape index: {1}]
  %7 = xla_tuple %s5, %s6
  %s8 = sld [smem:[#allocation0]]
  $region50: #{tpu_custom_call.1} parent=0
    _
  %s10 = ssub.s32 1, %s8
  %s11 = scalar_select 0, %s10, %s8
  $region1: #{tpu_custom_call.1} parent=0
    #allocation2 [shape = 'u8[12288]{0}', space=vmem, size = 0x3000, scoped, tag = 'input window, operand 0, single buffered']
    #allocation3 [shape = 's32[1]{0}', space=sflag, size = 0x4, scoped, tag = 'scoped memory for tpu_custom_call.1']
    #allocation4 [shape = 's32[1]{0}', space=sflag, size = 0x4, scoped, tag = 'scoped memory for tpu_custom_call.1']
    #allocation5 [shape = 'u8[98304]{0}', space=vmem, size = 0x18000, scoped, tag = 'input window, operand 1, single buffered']
    #allocation6 [shape = 's32[1]{0}', space=sflag, size = 0x4, scoped, tag = 'scoped memory for tpu_custom_call.1']
    #allocation7 [shape = 'u8[32768]{0}', space=vmem, size = 0x8000, scoped, tag = 'input window, operand 3, single buffered']
    #allocation8 [shape = 'u8[8192]{0}', space=vmem, size = 0x2000, scoped, tag = 'output window, operand 0, single buffered']
    #allocation9 [shape = 'u8[8192]{0}', space=vmem, size = 0x2000, scoped, tag = 'output window, operand 1, single buffered']
    #allocation10 [shape = 's32[1]{0}', space=sflag, size = 0x4, scoped, tag = 'scoped memory for tpu_custom_call.1']
    %12 = vsyncpa [#allocation3], 0
    %13 = vsyncpa [#allocation6], 0
    %14 = vsyncpa [#allocation4], 0
    %15 = vsyncpa [#allocation10], 0
    // Predicated region
    $region2: #{tpu_custom_call.1} parent=1 // pred_check
      _
    $region3: #{tpu_custom_call.1} parent=1 // pred_check_branch
      %17 = sbr.rel (0) target = $region5
    $region4: #{tpu_custom_call.1} parent=1 // pred_region
      %s19 = ssub.s32 384, 384
      %20 = vsyncadd [#allocation3], %s19
      %s21 = sshll.u32 [#allocation2], 4
      %s22 = int_to_ptr.vmem [resolvable:$true] %s21
      %27 = dma.hbm_to_vmem [thread:$0]  %s0, 384, %s22, [#allocation3], 192, 192, 12
    $region5: #{tpu_custom_call.1} parent=1 // pred_fallthru
      _
    // Predicated region
    $region6: #{tpu_custom_call.1} parent=1 // pred_check
      _
    $region7: #{tpu_custom_call.1} parent=1 // pred_check_branch
      %29 = sbr.rel (0) target = $region9
    $region8: #{tpu_custom_call.1} parent=1 // pred_region
      %s31 = ssub.s32 3072, 3072
      %32 = vsyncadd [#allocation6], %s31
      %s33 = sshll.u32 [#allocation5], 4
      %s34 = int_to_ptr.vmem [resolvable:$true] %s33
      %39 = dma.hbm_to_vmem [thread:$0]  %s1, 3072, %s34, [#allocation6], 64, 64, 4
    $region9: #{tpu_custom_call.1} parent=1 // pred_fallthru
      _
    // Predicated region
    $region10: #{tpu_custom_call.1} parent=1 // pred_check
      _
    $region11: #{tpu_custom_call.1} parent=1 // pred_check_branch
      %41 = sbr.rel (0) target = $region13
    $region12: #{tpu_custom_call.1} parent=1 // pred_region
      _
    $region13: #{tpu_custom_call.1} parent=1 // pred_fallthru
      _
    // Predicated region
    $region14: #{tpu_custom_call.1} parent=1 // pred_check
      _
    $region15: #{tpu_custom_call.1} parent=1 // pred_check_branch
      %43 = sbr.rel (0) target = $region17
    $region16: #{tpu_custom_call.1} parent=1 // pred_region
      %s45 = ssub.s32 1024, 1024
      %46 = vsyncadd [#allocation6], %s45
      %s47 = sshll.u32 [#allocation7], 4
      %s48 = int_to_ptr.vmem [resolvable:$true] %s47
      %53 = dma.hbm_to_vmem [thread:$0]  %s3, 1024, %s48, [#allocation6], 64, 64, 4
    $region17: #{tpu_custom_call.1} parent=1 // pred_fallthru
      _
    // Predicated region
    $region18: #{tpu_custom_call.1} parent=1 // pred_check
      _
    $region19: #{tpu_custom_call.1} parent=1 // pred_check_branch
      %55 = sbr.rel (0) target = $region21
    $region20: #{tpu_custom_call.1} parent=1 // pred_region
      _
    $region21: #{tpu_custom_call.1} parent=1 // pred_fallthru
      _
    // Predicated region
    $region22: #{tpu_custom_call.1} parent=1 // pred_check
      _
    $region23: #{tpu_custom_call.1} parent=1 // pred_check_branch
      %57 = sbr.rel (0) target = $region25
    $region24: #{tpu_custom_call.1} parent=1 // pred_region
      %58 = dma.done [#allocation3], 384
    $region25: #{tpu_custom_call.1} parent=1 // pred_fallthru
      _
    // Predicated region
    $region26: #{tpu_custom_call.1} parent=1 // pred_check
      _
    $region27: #{tpu_custom_call.1} parent=1 // pred_check_branch
      %60 = sbr.rel (0) target = $region29
    $region28: #{tpu_custom_call.1} parent=1 // pred_region
      %61 = dma.done [#allocation6], 3072
    $region29: #{tpu_custom_call.1} parent=1 // pred_fallthru
      _
    // Predicated region
    $region30: #{tpu_custom_call.1} parent=1 // pred_check
      _
    $region31: #{tpu_custom_call.1} parent=1 // pred_check_branch
      %63 = sbr.rel (0) target = $region33
    $region32: #{tpu_custom_call.1} parent=1 // pred_region
      %64 = dma.done [#allocation6], 1024
    $region33: #{tpu_custom_call.1} parent=1 // pred_fallthru
      _
    %v66 = vld [vmem:[#allocation2] sm:$0xff]
    %v67 = vld [vmem:[#allocation2 + $0x8] sm:$0xf]
    %v68 = vld [vmem:[#allocation2 + $0xc] sm:$0xff]
    %v69 = vld [vmem:[#allocation2 + $0x14] sm:$0xf]
    %v70 = vld [vmem:[#allocation5] sm:$0xf]
    %v71 = vld [vmem:[#allocation5 + $0x4] sm:$0xf]
    %v72 = vld [vmem:[#allocation5 + $0x8] sm:$0xf]
    %v73 = vld [vmem:[#allocation5 + $0xc] sm:$0xf]
    %v74 = vld [vmem:[#allocation5 + $0x10] sm:$0xf]
    %v75 = vld [vmem:[#allocation5 + $0x14] sm:$0xf]
    %v76 = vld [vmem:[#allocation5 + $0x18] sm:$0xf]
    %v77 = vld [vmem:[#allocation5 + $0x1c] sm:$0xf]
    %v78 = vld [vmem:[#allocation5 + $0x20] sm:$0xf]
    %v79 = vld [vmem:[#allocation5 + $0x24] sm:$0xf]
    %v80 = vld [vmem:[#allocation5 + $0x28] sm:$0xf]
    %v81 = vld [vmem:[#allocation5 + $0x2c] sm:$0xf]
    %v82 = vld [vmem:[#allocation5 + $0x30] sm:$0xf]
    %v83 = vld [vmem:[#allocation5 + $0x34] sm:$0xf]
    %v84 = vld [vmem:[#allocation5 + $0x38] sm:$0xf]
    %v85 = vld [vmem:[#allocation5 + $0x3c] sm:$0xf]
    %v86 = vld [vmem:[#allocation5 + $0x40] sm:$0xf]
    %v87 = vld [vmem:[#allocation5 + $0x44] sm:$0xf]
    %v88 = vld [vmem:[#allocation5 + $0x48] sm:$0xf]
    %v89 = vld [vmem:[#allocation5 + $0x4c] sm:$0xf]
    %v90 = vld [vmem:[#allocation5 + $0x50] sm:$0xf]
    %v91 = vld [vmem:[#allocation5 + $0x54] sm:$0xf]
    %v92 = vld [vmem:[#allocation5 + $0x58] sm:$0xf]
    %v93 = vld [vmem:[#allocation5 + $0x5c] sm:$0xf]
    %v94 = vld [vmem:[#allocation5 + $0x60] sm:$0xf]
    %v95 = vld [vmem:[#allocation5 + $0x64] sm:$0xf]
    %v96 = vld [vmem:[#allocation5 + $0x68] sm:$0xf]
    %v97 = vld [vmem:[#allocation5 + $0x6c] sm:$0xf]
    %v98 = vld [vmem:[#allocation5 + $0x70] sm:$0xf]
    %v99 = vld [vmem:[#allocation5 + $0x74] sm:$0xf]
    %v100 = vld [vmem:[#allocation5 + $0x78] sm:$0xf]
    %v101 = vld [vmem:[#allocation5 + $0x7c] sm:$0xf]
    %v102 = vld [vmem:[#allocation5 + $0x80] sm:$0xf]
    %v103 = vld [vmem:[#allocation5 + $0x84] sm:$0xf]
    %v104 = vld [vmem:[#allocation5 + $0x88] sm:$0xf]
    %v105 = vld [vmem:[#allocation5 + $0x8c] sm:$0xf]
    %v106 = vld [vmem:[#allocation5 + $0x90] sm:$0xf]
    %v107 = vld [vmem:[#allocation5 + $0x94] sm:$0xf]
    %v108 = vld [vmem:[#allocation5 + $0x98] sm:$0xf]
    %v109 = vld [vmem:[#allocation5 + $0x9c] sm:$0xf]
    %v110 = vld [vmem:[#allocation5 + $0xa0] sm:$0xf]
    %v111 = vld [vmem:[#allocation5 + $0xa4] sm:$0xf]
    %v112 = vld [vmem:[#allocation5 + $0xa8] sm:$0xf]
    %v113 = vld [vmem:[#allocation5 + $0xac] sm:$0xf]
    %v114 = vld [vmem:[#allocation5 + $0xb0] sm:$0xf]
    %v115 = vld [vmem:[#allocation5 + $0xb4] sm:$0xf]
    %v116 = vld [vmem:[#allocation5 + $0xb8] sm:$0xf]
    %v117 = vld [vmem:[#allocation5 + $0xbc] sm:$0xf]
    %v118 = vld [vmem:[%s2] sm:$0x1]
    %v120 = vlaneseq
    %v121 = vshrl.u32 %v120, 7
    %v122 = vsub.s32 0, %v121
    %v123 = vrot.slane %v118, %v122
    %v129 = vunpack.c.l.b16 %v66
    %v130 = vunpack.c.h.b16 %v66
    %v131 = vunpack.c.l.b16 %v67
    %v132 = vunpack.c.l.b16 %v68
    %v133 = vunpack.c.h.b16 %v68
    %v134 = vunpack.c.l.b16 %v69
    %v135 = vpack.c.b16 %v132, %v129
    %v136 = vpack.c.b16 %v133, %v130
    %v137 = vpack.c.b16 %v134, %v131
    %v189 = vunpack.c.l.b16 %v70
    %v190 = vunpack.c.l.b16 %v71
    %v191 = vunpack.c.l.b16 %v72
    %v192 = vunpack.c.l.b16 %v73
    %v193 = vunpack.c.l.b16 %v74
    %v194 = vunpack.c.l.b16 %v75
    %v195 = vunpack.c.l.b16 %v76
    %v196 = vunpack.c.l.b16 %v77
    %v197 = vunpack.c.l.b16 %v78
    %v198 = vunpack.c.l.b16 %v79
    %v199 = vunpack.c.l.b16 %v80
    %v200 = vunpack.c.l.b16 %v81
    %v201 = vunpack.c.l.b16 %v82
    %v202 = vunpack.c.l.b16 %v83
    %v203 = vunpack.c.l.b16 %v84
    %v204 = vunpack.c.l.b16 %v85
    %v205 = vunpack.c.l.b16 %v86
    %v206 = vunpack.c.l.b16 %v87
    %v207 = vunpack.c.l.b16 %v88
    %v208 = vunpack.c.l.b16 %v89
    %v209 = vunpack.c.l.b16 %v90
    %v210 = vunpack.c.l.b16 %v91
    %v211 = vunpack.c.l.b16 %v92
    %v212 = vunpack.c.l.b16 %v93
    %v213 = vunpack.c.l.b16 %v94
    %v214 = vunpack.c.l.b16 %v95
    %v215 = vunpack.c.l.b16 %v96
    %v216 = vunpack.c.l.b16 %v97
    %v217 = vunpack.c.l.b16 %v98
    %v218 = vunpack.c.l.b16 %v99
    %v219 = vunpack.c.l.b16 %v100
    %v220 = vunpack.c.l.b16 %v101
    %v221 = vunpack.c.l.b16 %v102
    %v222 = vunpack.c.l.b16 %v103
    %v223 = vunpack.c.l.b16 %v104
    %v224 = vunpack.c.l.b16 %v105
    %v225 = vunpack.c.l.b16 %v106
    %v226 = vunpack.c.l.b16 %v107
    %v227 = vunpack.c.l.b16 %v108
    %v228 = vunpack.c.l.b16 %v109
    %v229 = vunpack.c.l.b16 %v110
    %v230 = vunpack.c.l.b16 %v111
    %v231 = vunpack.c.l.b16 %v112
    %v232 = vunpack.c.l.b16 %v113
    %v233 = vunpack.c.l.b16 %v114
    %v234 = vunpack.c.l.b16 %v115
    %v235 = vunpack.c.l.b16 %v116
    %v236 = vunpack.c.l.b16 %v117
    %v237 = vpack.c.b16 %v190, %v189
    %v238 = vpack.c.b16 %v192, %v191
    %v239 = vpack.c.b16 %v194, %v193
    %v240 = vpack.c.b16 %v196, %v195
    %v241 = vpack.c.b16 %v198, %v197
    %v242 = vpack.c.b16 %v200, %v199
    %v243 = vpack.c.b16 %v202, %v201
    %v244 = vpack.c.b16 %v204, %v203
    %v245 = vpack.c.b16 %v206, %v205
    %v246 = vpack.c.b16 %v208, %v207
    %v247 = vpack.c.b16 %v210, %v209
    %v248 = vpack.c.b16 %v212, %v211
    %v249 = vpack.c.b16 %v214, %v213
    %v250 = vpack.c.b16 %v216, %v215
    %v251 = vpack.c.b16 %v218, %v217
    %v252 = vpack.c.b16 %v220, %v219
    %v253 = vpack.c.b16 %v222, %v221
    %v254 = vpack.c.b16 %v224, %v223
    %v255 = vpack.c.b16 %v226, %v225
    %v256 = vpack.c.b16 %v228, %v227
    %v257 = vpack.c.b16 %v230, %v229
    %v258 = vpack.c.b16 %v232, %v231
    %v259 = vpack.c.b16 %v234, %v233
    %v260 = vpack.c.b16 %v236, %v235
    %285 = vmatprep.subr.bf16.mxu0 0
    %286 = vmatpush1.bf16.msra.mxu0 %v244
    %287 = vmatprep.subr.bf16.mxu0 0
    %288 = vmatpush1.bf16.msra.mxu0 %v243
    %289 = vmatprep.subr.bf16.mxu0 0
    %290 = vmatpush1.bf16.msra.mxu0 %v242
    %291 = vmatprep.subr.bf16.mxu0 0
    %292 = vmatpush1.bf16.msra.mxu0 %v241
    %293 = vmatprep.subr.bf16.mxu0 0
    %294 = vmatpush1.bf16.msra.mxu0 %v240
    %295 = vmatprep.subr.bf16.mxu0 0
    %296 = vmatpush1.bf16.msra.mxu0 %v239
    %297 = vmatprep.subr.bf16.mxu0 0
    %298 = vmatpush1.bf16.msra.mxu0 %v238
    %299 = vmatprep.subr.bf16.mxu0 0
    %300 = vmatpush1.bf16.msra.mxu0 %v237
    %301 = vmatprep.subr.bf16.mxu0 0
    %302 = vmatpush2.bf16.msra.mxu0 %v252
    %303 = vmatprep.subr.bf16.mxu0 0
    %304 = vmatpush2.bf16.msra.mxu0 %v251
    %305 = vmatprep.subr.bf16.mxu0 0
    %306 = vmatpush2.bf16.msra.mxu0 %v250
    %307 = vmatprep.subr.bf16.mxu0 0
    %308 = vmatpush2.bf16.msra.mxu0 %v249
    %309 = vmatprep.subr.bf16.mxu0 0
    %310 = vmatpush2.bf16.msra.mxu0 %v248
    %311 = vmatprep.subr.bf16.mxu0 0
    %312 = vmatpush2.bf16.msra.mxu0 %v247
    %313 = vmatprep.subr.bf16.mxu0 0
    %314 = vmatpush2.bf16.msra.mxu0 %v246
    %315 = vmatprep.subr.bf16.mxu0 0
    %316 = vmatpush2.bf16.msra.mxu0 %v245
    %317 = vmatprep.mubr.bf16.mxu0 %v136
    %318 = vmatmul.mubr.bf16.gmra.mxu0 %v135
    %v319 = vpop.f32.mrf.mxu0
    %v320 = vadd.f32 %v123, %v319
    %v321 = vpop.f32.mrf.mxu0
    %v322 = vpop.f32.mrf.mxu0
    %v323 = vadd.f32 %v123, %v322
    %v324 = vpop.f32.mrf.mxu0
    %325 = vdwg.mxu0
    %326 = vmatprep.subr.bf16.mxu0 0
    %327 = vmatpush1.bf16.msra.mxu0 %v260
    %328 = vmatprep.subr.bf16.mxu0 0
    %329 = vmatpush1.bf16.msra.mxu0 %v259
    %330 = vmatprep.subr.bf16.mxu0 0
    %331 = vmatpush1.bf16.msra.mxu0 %v258
    %332 = vmatprep.subr.bf16.mxu0 0
    %333 = vmatpush1.bf16.msra.mxu0 %v257
    %334 = vmatprep.subr.bf16.mxu0 0
    %335 = vmatpush1.bf16.msra.mxu0 %v256
    %336 = vmatprep.subr.bf16.mxu0 0
    %337 = vmatpush1.bf16.msra.mxu0 %v255
    %338 = vmatprep.subr.bf16.mxu0 0
    %339 = vmatpush1.bf16.msra.mxu0 %v254
    %340 = vmatprep.subr.bf16.mxu0 0
    %341 = vmatpush1.bf16.msra.mxu0 %v253
    %342 = vmatprep.subr.bf16.mxu0 0
    %343 = vmatpush2.bf16.msra.mxu0 0
    %344 = vmatprep.subr.bf16.mxu0 0
    %345 = vmatpush2.bf16.msra.mxu0 0
    %346 = vmatprep.subr.bf16.mxu0 0
    %347 = vmatpush2.bf16.msra.mxu0 0
    %348 = vmatprep.subr.bf16.mxu0 0
    %349 = vmatpush2.bf16.msra.mxu0 0
    %350 = vmatprep.subr.bf16.mxu0 0
    %351 = vmatpush2.bf16.msra.mxu0 0
    %352 = vmatprep.subr.bf16.mxu0 0
    %353 = vmatpush2.bf16.msra.mxu0 0
    %354 = vmatprep.subr.bf16.mxu0 0
    %355 = vmatpush2.bf16.msra.mxu0 0
    %356 = vmatprep.subr.bf16.mxu0 0
    %357 = vmatpush2.bf16.msra.mxu0 0
    %358 = vmatprep.mubr.bf16.mxu0 0
    %359 = vmatmul.mubr.bf16.gmra.mxu0 %v137
    %v360 = vpop.f32.mrf.mxu0
    %v361 = vadd.f32 %v320, %v360
    %v362 = vpop.f32.mrf.mxu0
    %v363 = vpop.f32.mrf.mxu0
    %v364 = vadd.f32 %v323, %v363
    %v365 = vpop.f32.mrf.mxu0
    %366 = vdwg.mxu0
    %v367 = vmax.f32 %v361, 0.0
    %v368 = vmax.f32 %v364, 0.0
    %v369 = vpack.c.bf16 %v368, %v367
    %v370 = vld [vmem:[#allocation7] sm:$0xf]
    %v371 = vld [vmem:[#allocation7 + $0x4] sm:$0xf]
    %v372 = vld [vmem:[#allocation7 + $0x8] sm:$0xf]
    %v373 = vld [vmem:[#allocation7 + $0xc] sm:$0xf]
    %v374 = vld [vmem:[#allocation7 + $0x10] sm:$0xf]
    %v375 = vld [vmem:[#allocation7 + $0x14] sm:$0xf]
    %v376 = vld [vmem:[#allocation7 + $0x18] sm:$0xf]
    %v377 = vld [vmem:[#allocation7 + $0x1c] sm:$0xf]
    %v378 = vld [vmem:[#allocation7 + $0x20] sm:$0xf]
    %v379 = vld [vmem:[#allocation7 + $0x24] sm:$0xf]
    %v380 = vld [vmem:[#allocation7 + $0x28] sm:$0xf]
    %v381 = vld [vmem:[#allocation7 + $0x2c] sm:$0xf]
    %v382 = vld [vmem:[#allocation7 + $0x30] sm:$0xf]
    %v383 = vld [vmem:[#allocation7 + $0x34] sm:$0xf]
    %v384 = vld [vmem:[#allocation7 + $0x38] sm:$0xf]
    %v385 = vld [vmem:[#allocation7 + $0x3c] sm:$0xf]
    %v386 = vld [vmem:[%s4] sm:$0x1]
    %v388 = vlaneseq
    %v389 = vshrl.u32 %v388, 7
    %v390 = vsub.s32 0, %v389
    %v391 = vrot.slane %v386, %v390
    %v409 = vunpack.c.l.b16 %v370
    %v410 = vunpack.c.l.b16 %v371
    %v411 = vunpack.c.l.b16 %v372
    %v412 = vunpack.c.l.b16 %v373
    %v413 = vunpack.c.l.b16 %v374
    %v414 = vunpack.c.l.b16 %v375
    %v415 = vunpack.c.l.b16 %v376
    %v416 = vunpack.c.l.b16 %v377
    %v417 = vunpack.c.l.b16 %v378
    %v418 = vunpack.c.l.b16 %v379
    %v419 = vunpack.c.l.b16 %v380
    %v420 = vunpack.c.l.b16 %v381
    %v421 = vunpack.c.l.b16 %v382
    %v422 = vunpack.c.l.b16 %v383
    %v423 = vunpack.c.l.b16 %v384
    %v424 = vunpack.c.l.b16 %v385
    %v425 = vpack.c.b16 %v410, %v409
    %v426 = vpack.c.b16 %v412, %v411
    %v427 = vpack.c.b16 %v414, %v413
    %v428 = vpack.c.b16 %v416, %v415
    %v429 = vpack.c.b16 %v418, %v417
    %v430 = vpack.c.b16 %v420, %v419
    %v431 = vpack.c.b16 %v422, %v421
    %v432 = vpack.c.b16 %v424, %v423
    %441 = vmatprep.subr.bf16.mxu0 0
    %442 = vmatpush1.bf16.msra.mxu0 %v432
    %443 = vmatprep.subr.bf16.mxu0 0
    %444 = vmatpush1.bf16.msra.mxu0 %v431
    %445 = vmatprep.subr.bf16.mxu0 0
    %446 = vmatpush1.bf16.msra.mxu0 %v430
    %447 = vmatprep.subr.bf16.mxu0 0
    %448 = vmatpush1.bf16.msra.mxu0 %v429
    %449 = vmatprep.subr.bf16.mxu0 0
    %450 = vmatpush1.bf16.msra.mxu0 %v428
    %451 = vmatprep.subr.bf16.mxu0 0
    %452 = vmatpush1.bf16.msra.mxu0 %v427
    %453 = vmatprep.subr.bf16.mxu0 0
    %454 = vmatpush1.bf16.msra.mxu0 %v426
    %455 = vmatprep.subr.bf16.mxu0 0
    %456 = vmatpush1.bf16.msra.mxu0 %v425
    %457 = vmatprep.subr.bf16.mxu0 0
    %458 = vmatpush2.bf16.msra.mxu0 0
    %459 = vmatprep.subr.bf16.mxu0 0
    %460 = vmatpush2.bf16.msra.mxu0 0
    %461 = vmatprep.subr.bf16.mxu0 0
    %462 = vmatpush2.bf16.msra.mxu0 0
    %463 = vmatprep.subr.bf16.mxu0 0
    %464 = vmatpush2.bf16.msra.mxu0 0
    %465 = vmatprep.subr.bf16.mxu0 0
    %466 = vmatpush2.bf16.msra.mxu0 0
    %467 = vmatprep.subr.bf16.mxu0 0
    %468 = vmatpush2.bf16.msra.mxu0 0
    %469 = vmatprep.subr.bf16.mxu0 0
    %470 = vmatpush2.bf16.msra.mxu0 0
    %471 = vmatprep.subr.bf16.mxu0 0
    %472 = vmatpush2.bf16.msra.mxu0 0
    %473 = vmatprep.mubr.bf16.mxu0 0
    %474 = vmatmul.mubr.bf16.gmra.mxu0 %v369
    %v475 = vpop.f32.mrf.mxu0
    %v476 = vadd.f32 %v391, %v475
    %v477 = vpop.f32.mrf.mxu0
    %v478 = vpop.f32.mrf.mxu0
    %v479 = vadd.f32 %v391, %v478
    %v480 = vpop.f32.mrf.mxu0
    %481 = vdwg.mxu0
    %v482 = vxor.u32 %v476, 2147483648
    %v483 = vxor.u32 %v479, 2147483648
    %v484 = vmul.f32 %v482, 1.442695
    %v485 = vpow.pop %v484
    %v486 = vmul.f32 %v483, 1.442695
    %v487 = vpow.pop %v486
    %v488 = vadd.f32 %v485, 1.0
    %v489 = vadd.f32 %v487, 1.0
    %v490 = vrcp.pop %v488
    %v491 = vmul.f32 1.0, %v490
    %v492 = vrcp.pop %v489
    %v493 = vmul.f32 1.0, %v492
    %494 = vst [vmem:[#allocation8] sm:$0xff] %v491
    %495 = vst [vmem:[#allocation8 + $0x8] sm:$0xff] %v493
    %498 = vrot.lane.b32.xlu0 %v476, 1
    %v499 = vpop.permute.xlu0 %498
    %500 = vrot.lane.b32.xlu0 %v479, 1
    %v501 = vpop.permute.xlu0 %500
    %vm504 = vcmp.gt.f32.partialorder %v476, %v499
    %vm505 = vcmp.gt.f32.partialorder %v479, %v501
    %v506 = vsel %vm504, 1, 0
    %v507 = vsel %vm505, 1, 0
    %508 = vset.pattern.permute.xlu0 1
    %509 = vperm.xlu0 %508, %v506
    %v510 = vpop.permute.xlu0 %509
    %511 = vset.pattern.permute.xlu0 1
    %512 = vperm.xlu0 %511, %v507
    %v513 = vpop.permute.xlu0 %512
    %514 = vst [vmem:[#allocation9] sm:$0xff] %v510
    %515 = vst [vmem:[#allocation9 + $0x8] sm:$0xff] %v513
    // Predicated region
    $region34: #{tpu_custom_call.1} parent=1 // pred_check
      _
    $region35: #{tpu_custom_call.1} parent=1 // pred_check_branch
      %517 = sbr.rel (0) target = $region37
    $region36: #{tpu_custom_call.1} parent=1 // pred_region
      %s519 = ssub.s32 256, 256
      %520 = vsyncadd [#allocation4], %s519
      %s521 = sshll.u32 [#allocation8], 4
      %s522 = int_to_ptr.vmem [resolvable:$true] %s521
      %527 = dma.vmem_to_hbm [thread:$0]  %s522, 256, %s5, [#allocation4], 128, 128, 8
    $region37: #{tpu_custom_call.1} parent=1 // pred_fallthru
      _
    // Predicated region
    $region38: #{tpu_custom_call.1} parent=1 // pred_check
      _
    $region39: #{tpu_custom_call.1} parent=1 // pred_check_branch
      %529 = sbr.rel (0) target = $region41
    $region40: #{tpu_custom_call.1} parent=1 // pred_region
      %s531 = ssub.s32 256, 256
      %532 = vsyncadd [#allocation10], %s531
      %s533 = sshll.u32 [#allocation9], 4
      %s534 = int_to_ptr.vmem [resolvable:$true] %s533
      %539 = dma.vmem_to_hbm [thread:$0]  %s534, 256, %s6, [#allocation10], 128, 128, 8
    $region41: #{tpu_custom_call.1} parent=1 // pred_fallthru
      _
    // Predicated region
    $region42: #{tpu_custom_call.1} parent=1 // pred_check
      _
    $region43: #{tpu_custom_call.1} parent=1 // pred_check_branch
      %541 = sbr.rel (0) target = $region45
    $region44: #{tpu_custom_call.1} parent=1 // pred_region
      %542 = dma.done [#allocation4], 256
    $region45: #{tpu_custom_call.1} parent=1 // pred_fallthru
      _
    // Predicated region
    $region46: #{tpu_custom_call.1} parent=1 // pred_check
      _
    $region47: #{tpu_custom_call.1} parent=1 // pred_check_branch
      %544 = sbr.rel (0) target = $region49
    $region48: #{tpu_custom_call.1} parent=1 // pred_region
      %545 = dma.done [#allocation10], 256
    $region49: #{tpu_custom_call.1} parent=1 // pred_fallthru
      _
    %546 = vsyncpa [#allocation3], 1
    %547 = vsyncpa [#allocation6], 1
    %548 = vsyncpa [#allocation4], 1
    %549 = vsyncpa [#allocation10], 1

</llo_original>
